<compile_context>
chip_gen: v6e
topology: v6e:2x2x1
jax: 0.10.0
libtpu: 0.0.40
codegen_flags: <defaults>
</compile_context>

<pallas_src>
import functools

import jax
import jax.numpy as jnp
from jax.experimental import pallas as pl
from jax.experimental.pallas import tpu as pltpu


def _round_up(x, m):
    return ((x + m - 1) // m) * m


def _cdiv(a, b):
    return (a + b - 1) // b


def _mlp_kernel(x_ref, w1_ref, b1_ref, w2_ref, b2_ref, w3_ref, b3_ref, o_ref):
    # grad_reverse is identity in the forward pass (only negates/scales gradients).
    # TODO(synk): gradient reversal is backward-only; it would need jax.custom_vjp around
    # this forward (scaling the cotangent by -alpha) — no forward-kernel equivalent.
    x = x_ref[...]                                                    # f32 (TILE_B, 32)
    h1 = jnp.dot(x, w1_ref[...], preferred_element_type=jnp.float32) + b1_ref[...]
    h1 = jnp.maximum(h1, 0.0)                                         # f32 (TILE_B, 128)
    h2 = jnp.dot(h1, w2_ref[...], preferred_element_type=jnp.float32) + b2_ref[...]
    h2 = jnp.maximum(h2, 0.0)                                         # f32 (TILE_B, 64)
    o_ref[...] = (jnp.dot(h2, w3_ref[...], preferred_element_type=jnp.float32)
                  + b3_ref[...])                                      # f32 (TILE_B, 4)


def domain_classifier_forward(z_inv, params, alpha=1.0, tile_b=4096):
    """Fused 3-layer MLP head. z_inv: (B, z_dim_inv) f32 -> (B, num_domains) f32."""
    del alpha  # forward is identity; only relevant to a (not implemented) backward.
    w1, b1, w2, b2, w3, b3 = params
    B, d_in = z_inv.shape
    d_h1 = w1.shape[1]
    d_h2 = w2.shape[1]
    num_domains = w3.shape[1]

    # Pad rows only to the f32 sublane multiple (8); ragged last block handled by the grid.
    b_pad = _round_up(B, 8)
    x = z_inv if b_pad == B else jnp.pad(z_inv, ((0, b_pad - B), (0, 0)))

    # Tile size: multiple of 8, <= target, and at most ceil(b_pad/2) (rounded to 8) so
    # there are >= 2 batch tiles when the batch is big enough (feeds both v7x TCs).
    half = _round_up(_cdiv(b_pad, 2), 8)
    tile_b = max(8, min(_round_up(tile_b, 8), half, b_pad))
    grid = (_cdiv(b_pad, tile_b),)

    w1f, w2f, w3f = (w.astype(jnp.float32) for w in (w1, w2, w3))
    b1f, b2f, b3f = (b.astype(jnp.float32) for b in (b1, b2, b3))

    flops = 2 * b_pad * (d_in * d_h1 + d_h1 * d_h2 + d_h2 * num_domains)
    bytes_accessed = (
        b_pad * d_in * 4                       # x (f32)
        + b_pad * num_domains * 4              # out (f32, narrow)
        + 4 * (w1f.size + w2f.size + w3f.size + b1f.size + b2f.size + b3f.size)
    )

    const = lambda i: (0, 0)  # weights/biases: same block every step -> stay resident
    out = pl.pallas_call(
        _mlp_kernel,
        out_shape=jax.ShapeDtypeStruct((b_pad, num_domains), jnp.float32),
        grid=grid,
        in_specs=[
            pl.BlockSpec((tile_b, d_in), lambda i: (i, 0)),   # x: batch-tiled
            pl.BlockSpec(w1f.shape, const),
            pl.BlockSpec(b1f.shape, const),
            pl.BlockSpec(w2f.shape, const),
            pl.BlockSpec(b2f.shape, const),
            pl.BlockSpec(w3f.shape, const),
            pl.BlockSpec(b3f.shape, const),
        ],
        out_specs=pl.BlockSpec((tile_b, num_domains), lambda i: (i, 0)),
        compiler_params=pltpu.CompilerParams(
            dimension_semantics=("parallel",),
            vmem_limit_bytes=32 * 1024 * 1024,
        ),
        cost_estimate=pl.CostEstimate(
            flops=flops, transcendentals=0, bytes_accessed=bytes_accessed),
    )(x, w1f, b1f, w2f, b2f, w3f, b3f)

    return out if b_pad == B else out[:B]


def init_params(key, z_dim_inv=32, num_domains=4):
    """Deterministic synthetic parameters (PyTorch Linear weights, stored transposed)."""
    k1, k2, k3, k4, k5, k6 = jax.random.split(key, 6)
    w1 = jax.random.normal(k1, (z_dim_inv, 128), jnp.float32) * 0.1
    b1 = jax.random.normal(k2, (1, 128), jnp.float32) * 0.1
    w2 = jax.random.normal(k3, (128, 64), jnp.float32) * 0.1
    b2 = jax.random.normal(k4, (1, 64), jnp.float32) * 0.1
    w3 = jax.random.normal(k5, (64, num_domains), jnp.float32) * 0.1
    b3 = jax.random.normal(k6, (1, num_domains), jnp.float32) * 0.1
    return (w1, b1, w2, b2, w3, b3)


def _reference_forward(z_inv, params):
    """Pure-JAX f32 reference of the PyTorch module forward."""
    w1, b1, w2, b2, w3, b3 = params
    h1 = jnp.maximum(z_inv @ w1 + b1, 0.0)
    h2 = jnp.maximum(h1 @ w2 + b2, 0.0)
    return h2 @ w3 + b3


if __name__ == "__main__":
    key = jax.random.PRNGKey(0)
    k_x, k_p = jax.random.split(key)

    B, z_dim_inv, num_domains = 8, 32, 4
    z_inv = jax.random.normal(k_x, (B, z_dim_inv), jnp.float32)
    params = init_params(k_p, z_dim_inv=z_dim_inv, num_domains=num_domains)

    fwd = jax.jit(functools.partial(domain_classifier_forward, tile_b=4096))
    out = jax.block_until_ready(fwd(z_inv, params))

    ref = _reference_forward(z_inv, params)
    assert out.shape == (B, num_domains)
    # f32 operands with f32 accumulation; default MXU precision -> modest tolerance.
    assert jnp.allclose(out, ref, atol=2e-2, rtol=2e-2), "mismatch vs reference"

    print("KERNEL_OK")
</pallas_src>

<mosaic_0001>
module attributes {stable_mosaic.version = 11 : i64} {
  func.func @_mlp_kernel(%arg0: i32, %arg1: memref<8x32xf32, #tpu.memory_space<vmem>>, %arg2: memref<32x128xf32, #tpu.memory_space<vmem>>, %arg3: memref<1x128xf32, #tpu.memory_space<vmem>>, %arg4: memref<128x64xf32, #tpu.memory_space<vmem>>, %arg5: memref<1x64xf32, #tpu.memory_space<vmem>>, %arg6: memref<64x4xf32, #tpu.memory_space<vmem>>, %arg7: memref<1x4xf32, #tpu.memory_space<vmem>>, %arg8: memref<8x4xf32, #tpu.memory_space<vmem>>) attributes {dimension_semantics = [#tpu.dimension_semantics<parallel>], iteration_bounds = array<i64: 1>, scalar_prefetch = 0 : i64, scratch_operands = 0 : i64, tpu.core_type = #tpu.core_type<tc>, window_params = [{transform_indices = @transform_0, window_bounds = array<i64: 8, 32>}, {pipeline_mode = #tpu.pipeline_mode<synchronous>, transform_indices = @transform_1, window_bounds = array<i64: 32, 128>}, {pipeline_mode = #tpu.pipeline_mode<synchronous>, transform_indices = @transform_2, window_bounds = array<i64: 1, 128>}, {pipeline_mode = #tpu.pipeline_mode<synchronous>, transform_indices = @transform_3, window_bounds = array<i64: 128, 64>}, {pipeline_mode = #tpu.pipeline_mode<synchronous>, transform_indices = @transform_4, window_bounds = array<i64: 1, 64>}, {pipeline_mode = #tpu.pipeline_mode<synchronous>, transform_indices = @transform_5, window_bounds = array<i64: 64, 4>}, {pipeline_mode = #tpu.pipeline_mode<synchronous>, transform_indices = @transform_6, window_bounds = array<i64: 1, 4>}, {transform_indices = @transform_7, window_bounds = array<i64: 8, 4>}]} {
    %c0 = arith.constant 0 : index
    %c0_0 = arith.constant 0 : index
    %0 = vector.load %arg1[%c0, %c0_0] : memref<8x32xf32, #tpu.memory_space<vmem>>, vector<8x32xf32>
    %c0_1 = arith.constant 0 : index
    %c0_2 = arith.constant 0 : index
    %1 = vector.load %arg2[%c0_1, %c0_2] : memref<32x128xf32, #tpu.memory_space<vmem>>, vector<32x128xf32>
    %cst = arith.constant dense<0.000000e+00> : vector<8x128xf32>
    %2 = tpu.matmul %0, %1, %cst {dimension_numbers = #tpu.dot_dimension_numbers<[1], [0], [0], [1], [0, 0, 1, 1], [], []>} : vector<8x32xf32>, vector<32x128xf32>, vector<8x128xf32> -> vector<8x128xf32>
    %c0_3 = arith.constant 0 : index
    %c0_4 = arith.constant 0 : index
    %3 = vector.load %arg3[%c0_3, %c0_4] : memref<1x128xf32, #tpu.memory_space<vmem>>, vector<1x128xf32>
    %4 = vector.broadcast %3 : vector<1x128xf32> to vector<8x128xf32>
    %5 = arith.addf %2, %4 : vector<8x128xf32>
    %cst_5 = arith.constant 0.000000e+00 : f32
    %6 = vector.broadcast %cst_5 : f32 to vector<8x128xf32>
    %7 = arith.maximumf %5, %6 : vector<8x128xf32>
    %c0_6 = arith.constant 0 : index
    %c0_7 = arith.constant 0 : index
    %8 = vector.load %arg4[%c0_6, %c0_7] : memref<128x64xf32, #tpu.memory_space<vmem>>, vector<128x64xf32>
    %cst_8 = arith.constant dense<0.000000e+00> : vector<8x64xf32>
    %9 = tpu.matmul %7, %8, %cst_8 {dimension_numbers = #tpu.dot_dimension_numbers<[1], [0], [0], [1], [0, 0, 1, 1], [], []>} : vector<8x128xf32>, vector<128x64xf32>, vector<8x64xf32> -> vector<8x64xf32>
    %c0_9 = arith.constant 0 : index
    %c0_10 = arith.constant 0 : index
    %10 = vector.load %arg5[%c0_9, %c0_10] : memref<1x64xf32, #tpu.memory_space<vmem>>, vector<1x64xf32>
    %11 = vector.broadcast %10 : vector<1x64xf32> to vector<8x64xf32>
    %12 = arith.addf %9, %11 : vector<8x64xf32>
    %cst_11 = arith.constant 0.000000e+00 : f32
    %13 = vector.broadcast %cst_11 : f32 to vector<8x64xf32>
    %14 = arith.maximumf %12, %13 : vector<8x64xf32>
    %c0_12 = arith.constant 0 : index
    %c0_13 = arith.constant 0 : index
    %15 = vector.load %arg6[%c0_12, %c0_13] : memref<64x4xf32, #tpu.memory_space<vmem>>, vector<64x4xf32>
    %cst_14 = arith.constant dense<0.000000e+00> : vector<8x4xf32>
    %16 = tpu.matmul %14, %15, %cst_14 {dimension_numbers = #tpu.dot_dimension_numbers<[1], [0], [0], [1], [0, 0, 1, 1], [], []>} : vector<8x64xf32>, vector<64x4xf32>, vector<8x4xf32> -> vector<8x4xf32>
    %c0_15 = arith.constant 0 : index
    %c0_16 = arith.constant 0 : index
    %17 = vector.load %arg7[%c0_15, %c0_16] : memref<1x4xf32, #tpu.memory_space<vmem>>, vector<1x4xf32>
    %18 = vector.broadcast %17 : vector<1x4xf32> to vector<8x4xf32>
    %19 = arith.addf %16, %18 : vector<8x4xf32>
    %c0_17 = arith.constant 0 : index
    %c0_18 = arith.constant 0 : index
    %20 = vector.load %arg8[%c0_17, %c0_18] : memref<8x4xf32, #tpu.memory_space<vmem>>, vector<8x4xf32>
    tpu.vector_store %arg8[%c0_17, %c0_18], %19 {strides = array<i32>} : memref<8x4xf32, #tpu.memory_space<vmem>>, vector<8x4xf32>,
    return
  }
  func.func @transform_0(%arg0: i32) -> (i32, i32) {
    %c0_i32 = arith.constant 0 : i32
    %c0_i32_0 = arith.constant 0 : i32
    return %arg0, %c0_i32 : i32, i32
  }
  func.func @transform_1(%arg0: i32) -> (i32, i32) {
    %c0_i32 = arith.constant 0 : i32
    %c0_i32_0 = arith.constant 0 : i32
    %c0_i32_1 = arith.constant 0 : i32
    return %c0_i32, %c0_i32_0 : i32, i32
  }
  func.func @transform_2(%arg0: i32) -> (i32, i32) {
    %c0_i32 = arith.constant 0 : i32
    %c0_i32_0 = arith.constant 0 : i32
    %c0_i32_1 = arith.constant 0 : i32
    return %c0_i32, %c0_i32_0 : i32, i32
  }
  func.func @transform_3(%arg0: i32) -> (i32, i32) {
    %c0_i32 = arith.constant 0 : i32
    %c0_i32_0 = arith.constant 0 : i32
    %c0_i32_1 = arith.constant 0 : i32
    return %c0_i32, %c0_i32_0 : i32, i32
  }
  func.func @transform_4(%arg0: i32) -> (i32, i32) {
    %c0_i32 = arith.constant 0 : i32
    %c0_i32_0 = arith.constant 0 : i32
    %c0_i32_1 = arith.constant 0 : i32
    return %c0_i32, %c0_i32_0 : i32, i32
  }
  func.func @transform_5(%arg0: i32) -> (i32, i32) {
    %c0_i32 = arith.constant 0 : i32
    %c0_i32_0 = arith.constant 0 : i32
    %c0_i32_1 = arith.constant 0 : i32
    return %c0_i32, %c0_i32_0 : i32, i32
  }
  func.func @transform_6(%arg0: i32) -> (i32, i32) {
    %c0_i32 = arith.constant 0 : i32
    %c0_i32_0 = arith.constant 0 : i32
    %c0_i32_1 = arith.constant 0 : i32
    return %c0_i32, %c0_i32_0 : i32, i32
  }
  func.func @transform_7(%arg0: i32) -> (i32, i32) {
    %c0_i32 = arith.constant 0 : i32
    %c0_i32_0 = arith.constant 0 : i32
    return %arg0, %c0_i32 : i32, i32
  }
}

</mosaic_0001>

<llo_original>
// kernel: domain_classifier_forward.1
$region0: #{domain_classifier_forward.1}
  #allocation0 [shape = 'u32[]', space=smem, size = 0x4, offset = 0x4, fixed_abs, tag = 'smem constant byte address 0x4 - core index']
  #allocation1 [shape = 'u32[144,128]{1,0:T(1,128)}', space=vmem, size = 0x12000, scoped, tag = 'internal scratch']
  %s0 = inlined_call_operand.vmem [shape: f32[8,32], index: 0, kind: input, shape index: {}]
  %s1 = inlined_call_operand.vmem [shape: f32[32,128], index: 1, kind: input, shape index: {}]
  %s2 = inlined_call_operand.vmem [shape: f32[1,128], index: 2, kind: input, shape index: {}]
  %s3 = inlined_call_operand.vmem [shape: f32[128,64], index: 3, kind: input, shape index: {}]
  %s4 = inlined_call_operand.vmem [shape: f32[1,64], index: 4, kind: input, shape index: {}]
  %s5 = inlined_call_operand.vmem [shape: f32[64,4], index: 5, kind: input, shape index: {}]
  %s6 = inlined_call_operand.vmem [shape: f32[1,4], index: 6, kind: input, shape index: {}]
  %s7 = inlined_call_operand.vmem [shape: f32[8,4], index: 7, kind: output, shape index: {}]
  %s8 = sld [smem:[#allocation0]]
  $region38: #{domain_classifier_forward.1} parent=0
    _
  %s10 = ssub.s32 1, %s8
  %s11 = scalar_select 0, %s10, %s8
  // Predicated region
  $region2: #{domain_classifier_forward.1} parent=0 // pred_check
    _
  $region3: #{domain_classifier_forward.1} parent=0 // pred_check_branch
    %13 = sbr.rel (0) target = $region5
  $region4: #{domain_classifier_forward.1} parent=0 // pred_region
    _
  $region5: #{domain_classifier_forward.1} parent=0 // pred_fallthru
    _
  // Predicated region
  $region6: #{domain_classifier_forward.1} parent=0 // pred_check
    _
  $region7: #{domain_classifier_forward.1} parent=0 // pred_check_branch
    %15 = sbr.rel (0) target = $region9
  $region8: #{domain_classifier_forward.1} parent=0 // pred_region
    _
  $region9: #{domain_classifier_forward.1} parent=0 // pred_fallthru
    _
  // Predicated region
  $region10: #{domain_classifier_forward.1} parent=0 // pred_check
    _
  $region11: #{domain_classifier_forward.1} parent=0 // pred_check_branch
    %17 = sbr.rel (0) target = $region13
  $region12: #{domain_classifier_forward.1} parent=0 // pred_region
    _
  $region13: #{domain_classifier_forward.1} parent=0 // pred_fallthru
    _
  // Predicated region
  $region14: #{domain_classifier_forward.1} parent=0 // pred_check
    _
  $region15: #{domain_classifier_forward.1} parent=0 // pred_check_branch
    %19 = sbr.rel (0) target = $region17
  $region16: #{domain_classifier_forward.1} parent=0 // pred_region
    _
  $region17: #{domain_classifier_forward.1} parent=0 // pred_fallthru
    _
  // Predicated region
  $region18: #{domain_classifier_forward.1} parent=0 // pred_check
    _
  $region19: #{domain_classifier_forward.1} parent=0 // pred_check_branch
    %21 = sbr.rel (0) target = $region21
  $region20: #{domain_classifier_forward.1} parent=0 // pred_region
    _
  $region21: #{domain_classifier_forward.1} parent=0 // pred_fallthru
    _
  // Predicated region
  $region22: #{domain_classifier_forward.1} parent=0 // pred_check
    _
  $region23: #{domain_classifier_forward.1} parent=0 // pred_check_branch
    %23 = sbr.rel (0) target = $region25
  $region24: #{domain_classifier_forward.1} parent=0 // pred_region
    _
  $region25: #{domain_classifier_forward.1} parent=0 // pred_fallthru
    _
  // Predicated region
  $region26: #{domain_classifier_forward.1} parent=0 // pred_check
    _
  $region27: #{domain_classifier_forward.1} parent=0 // pred_check_branch
    %25 = sbr.rel (0) target = $region29
  $region28: #{domain_classifier_forward.1} parent=0 // pred_region
    _
  $region29: #{domain_classifier_forward.1} parent=0 // pred_fallthru
    _
  %v26 = vld [vmem:[%s0] sm:$0xff]
  %v27 = vld [vmem:[%s1] sm:$0xff]
  %v28 = vld [vmem:[%s1 + $0x8] sm:$0xff]
  %v29 = vld [vmem:[%s1 + $0x10] sm:$0xff]
  %v30 = vld [vmem:[%s1 + $0x18] sm:$0xff]
  %v31 = vld [vmem:[%s2] sm:$0x1]
  %v33 = vlaneseq
  %v34 = vshrl.u32 %v33, 7
  %v35 = vsub.s32 0, %v34
  %v36 = vrot.slane %v31, %v35
  %vm38 = vcmask 261120
  %v40 = vsel %vm38, %v26, 0
  %42 = vmatprep.subr.mxu0 0.0
  %43 = vmatpush1.msra.mxu0 0.0
  %44 = vmatprep.subr.mxu0 0.0
  %45 = vmatpush1.msra.mxu0 0.0
  %46 = vmatprep.subr.mxu0 0.0
  %47 = vmatpush1.msra.mxu0 0.0
  %48 = vmatprep.subr.mxu0 0.0
  %49 = vmatpush1.msra.mxu0 0.0
  %50 = vmatprep.subr.mxu0 0.0
  %51 = vmatpush1.msra.mxu0 0.0
  %52 = vmatprep.subr.mxu0 0.0
  %53 = vmatpush1.msra.mxu0 0.0
  %54 = vmatprep.subr.mxu0 0.0
  %55 = vmatpush1.msra.mxu0 0.0
  %56 = vmatprep.subr.mxu0 0.0
  %57 = vmatpush1.msra.mxu0 0.0
  %58 = vmatprep.subr.mxu0 0.0
  %59 = vmatpush1.msra.mxu0 0.0
  %60 = vmatprep.subr.mxu0 0.0
  %61 = vmatpush1.msra.mxu0 0.0
  %62 = vmatprep.subr.mxu0 0.0
  %63 = vmatpush1.msra.mxu0 0.0
  %64 = vmatprep.subr.mxu0 0.0
  %65 = vmatpush1.msra.mxu0 0.0
  %66 = vmatprep.subr.mxu0 0.0
  %67 = vmatpush1.msra.mxu0 %v30
  %68 = vmatprep.subr.mxu0 0.0
  %69 = vmatpush1.msra.mxu0 %v29
  %70 = vmatprep.subr.mxu0 0.0
  %71 = vmatpush1.msra.mxu0 %v28
  %72 = vmatprep.subr.mxu0 0.0
  %73 = vmatpush1.msra.mxu0 %v27
  %74 = vmatprep.subr.mxu0 0.0
  %75 = vmatpush2.msra.mxu0 0.0
  %76 = vmatprep.subr.mxu0 0.0
  %77 = vmatpush2.msra.mxu0 0.0
  %78 = vmatprep.subr.mxu0 0.0
  %79 = vmatpush2.msra.mxu0 0.0
  %80 = vmatprep.subr.mxu0 0.0
  %81 = vmatpush2.msra.mxu0 0.0
  %82 = vmatprep.subr.mxu0 0.0
  %83 = vmatpush2.msra.mxu0 0.0
  %84 = vmatprep.subr.mxu0 0.0
  %85 = vmatpush2.msra.mxu0 0.0
  %86 = vmatprep.subr.mxu0 0.0
  %87 = vmatpush2.msra.mxu0 0.0
  %88 = vmatprep.subr.mxu0 0.0
  %89 = vmatpush2.msra.mxu0 0.0
  %90 = vmatprep.subr.mxu0 0.0
  %91 = vmatpush2.msra.mxu0 0.0
  %92 = vmatprep.subr.mxu0 0.0
  %93 = vmatpush2.msra.mxu0 0.0
  %94 = vmatprep.subr.mxu0 0.0
  %95 = vmatpush2.msra.mxu0 0.0
  %96 = vmatprep.subr.mxu0 0.0
  %97 = vmatpush2.msra.mxu0 0.0
  %98 = vmatprep.subr.mxu0 0.0
  %99 = vmatpush2.msra.mxu0 0.0
  %100 = vmatprep.subr.mxu0 0.0
  %101 = vmatpush2.msra.mxu0 0.0
  %102 = vmatprep.subr.mxu0 0.0
  %103 = vmatpush2.msra.mxu0 0.0
  %104 = vmatprep.subr.mxu0 0.0
  %105 = vmatpush2.msra.mxu0 0.0
  %106 = vmatprep.mubr.f32.mxu0 0.0
  %107 = vmatmul.mubr.f32.gmra.mxu0 %v40
  %v108 = vpop.f32.mrf.mxu0
  %v109 = vadd.f32 %v36, %v108
  %v110 = vpop.f32.mrf.mxu0
  %111 = vdwg.mxu0
  %v112 = vmax.f32 %v109, 0.0
  %v113 = vld [vmem:[%s3] sm:$0xff]
  %v114 = vld [vmem:[%s3 + $0x8] sm:$0xff]
  %v115 = vld [vmem:[%s3 + $0x10] sm:$0xff]
  %v116 = vld [vmem:[%s3 + $0x18] sm:$0xff]
  %v117 = vld [vmem:[%s3 + $0x20] sm:$0xff]
  %v118 = vld [vmem:[%s3 + $0x28] sm:$0xff]
  %v119 = vld [vmem:[%s3 + $0x30] sm:$0xff]
  %v120 = vld [vmem:[%s3 + $0x38] sm:$0xff]
  %v121 = vld [vmem:[%s3 + $0x40] sm:$0xff]
  %v122 = vld [vmem:[%s3 + $0x48] sm:$0xff]
  %v123 = vld [vmem:[%s3 + $0x50] sm:$0xff]
  %v124 = vld [vmem:[%s3 + $0x58] sm:$0xff]
  %v125 = vld [vmem:[%s3 + $0x60] sm:$0xff]
  %v126 = vld [vmem:[%s3 + $0x68] sm:$0xff]
  %v127 = vld [vmem:[%s3 + $0x70] sm:$0xff]
  %v128 = vld [vmem:[%s3 + $0x78] sm:$0xff]
  %v129 = vld [vmem:[%s4] sm:$0x1]
  %v131 = vlaneseq
  %v132 = vshrl.u32 %v131, 7
  %v133 = vsub.s32 0, %v132
  %v134 = vrot.slane %v129, %v133
  %136 = vmatprep.subr.mxu0 0.0
  %137 = vmatpush1.msra.mxu0 %v128
  %138 = vmatprep.subr.mxu0 0.0
  %139 = vmatpush1.msra.mxu0 %v127
  %140 = vmatprep.subr.mxu0 0.0
  %141 = vmatpush1.msra.mxu0 %v126
  %142 = vmatprep.subr.mxu0 0.0
  %143 = vmatpush1.msra.mxu0 %v125
  %144 = vmatprep.subr.mxu0 0.0
  %145 = vmatpush1.msra.mxu0 %v124
  %146 = vmatprep.subr.mxu0 0.0
  %147 = vmatpush1.msra.mxu0 %v123
  %148 = vmatprep.subr.mxu0 0.0
  %149 = vmatpush1.msra.mxu0 %v122
  %150 = vmatprep.subr.mxu0 0.0
  %151 = vmatpush1.msra.mxu0 %v121
  %152 = vmatprep.subr.mxu0 0.0
  %153 = vmatpush1.msra.mxu0 %v120
  %154 = vmatprep.subr.mxu0 0.0
  %155 = vmatpush1.msra.mxu0 %v119
  %156 = vmatprep.subr.mxu0 0.0
  %157 = vmatpush1.msra.mxu0 %v118
  %158 = vmatprep.subr.mxu0 0.0
  %159 = vmatpush1.msra.mxu0 %v117
  %160 = vmatprep.subr.mxu0 0.0
  %161 = vmatpush1.msra.mxu0 %v116
  %162 = vmatprep.subr.mxu0 0.0
  %163 = vmatpush1.msra.mxu0 %v115
  %164 = vmatprep.subr.mxu0 0.0
  %165 = vmatpush1.msra.mxu0 %v114
  %166 = vmatprep.subr.mxu0 0.0
  %167 = vmatpush1.msra.mxu0 %v113
  %168 = vmatprep.subr.mxu0 0.0
  %169 = vmatpush2.msra.mxu0 0.0
  %170 = vmatprep.subr.mxu0 0.0
  %171 = vmatpush2.msra.mxu0 0.0
  %172 = vmatprep.subr.mxu0 0.0
  %173 = vmatpush2.msra.mxu0 0.0
  %174 = vmatprep.subr.mxu0 0.0
  %175 = vmatpush2.msra.mxu0 0.0
  %176 = vmatprep.subr.mxu0 0.0
  %177 = vmatpush2.msra.mxu0 0.0
  %178 = vmatprep.subr.mxu0 0.0
  %179 = vmatpush2.msra.mxu0 0.0
  %180 = vmatprep.subr.mxu0 0.0
  %181 = vmatpush2.msra.mxu0 0.0
  %182 = vmatprep.subr.mxu0 0.0
  %183 = vmatpush2.msra.mxu0 0.0
  %184 = vmatprep.subr.mxu0 0.0
  %185 = vmatpush2.msra.mxu0 0.0
  %186 = vmatprep.subr.mxu0 0.0
  %187 = vmatpush2.msra.mxu0 0.0
  %188 = vmatprep.subr.mxu0 0.0
  %189 = vmatpush2.msra.mxu0 0.0
  %190 = vmatprep.subr.mxu0 0.0
  %191 = vmatpush2.msra.mxu0 0.0
  %192 = vmatprep.subr.mxu0 0.0
  %193 = vmatpush2.msra.mxu0 0.0
  %194 = vmatprep.subr.mxu0 0.0
  %195 = vmatpush2.msra.mxu0 0.0
  %196 = vmatprep.subr.mxu0 0.0
  %197 = vmatpush2.msra.mxu0 0.0
  %198 = vmatprep.subr.mxu0 0.0
  %199 = vmatpush2.msra.mxu0 0.0
  %200 = vmatprep.mubr.f32.mxu0 0.0
  %201 = vmatmul.mubr.f32.gmra.mxu0 %v112
  %v202 = vpop.f32.mrf.mxu0
  %v203 = vadd.f32 %v134, %v202
  %v204 = vpop.f32.mrf.mxu0
  %205 = vdwg.mxu0
  %v206 = vmax.f32 %v203, 0.0
  %v207 = vld [vmem:[%s5] sm:$0xff]
  %v208 = vld [vmem:[%s5 + $0x8] sm:$0xff]
  %v209 = vld [vmem:[%s5 + $0x10] sm:$0xff]
  %v210 = vld [vmem:[%s5 + $0x18] sm:$0xff]
  %v211 = vld [vmem:[%s5 + $0x20] sm:$0xff]
  %v212 = vld [vmem:[%s5 + $0x28] sm:$0xff]
  %v213 = vld [vmem:[%s5 + $0x30] sm:$0xff]
  %v214 = vld [vmem:[%s5 + $0x38] sm:$0xff]
  %v215 = vld [vmem:[%s6] sm:$0x1]
  %v217 = vlaneseq
  %v218 = vshrl.u32 %v217, 7
  %v219 = vsub.s32 0, %v218
  %v220 = vrot.slane %v215, %v219
  %vm222 = vcmask 523264
  %v224 = vsel %vm222, %v206, 0
  %226 = vmatprep.subr.mxu0 0.0
  %227 = vmatpush1.msra.mxu0 0.0
  %228 = vmatprep.subr.mxu0 0.0
  %229 = vmatpush1.msra.mxu0 0.0
  %230 = vmatprep.subr.mxu0 0.0
  %231 = vmatpush1.msra.mxu0 0.0
  %232 = vmatprep.subr.mxu0 0.0
  %233 = vmatpush1.msra.mxu0 0.0
  %234 = vmatprep.subr.mxu0 0.0
  %235 = vmatpush1.msra.mxu0 0.0
  %236 = vmatprep.subr.mxu0 0.0
  %237 = vmatpush1.msra.mxu0 0.0
  %238 = vmatprep.subr.mxu0 0.0
  %239 = vmatpush1.msra.mxu0 0.0
  %240 = vmatprep.subr.mxu0 0.0
  %241 = vmatpush1.msra.mxu0 0.0
  %242 = vmatprep.subr.mxu0 0.0
  %243 = vmatpush1.msra.mxu0 %v214
  %244 = vmatprep.subr.mxu0 0.0
  %245 = vmatpush1.msra.mxu0 %v213
  %246 = vmatprep.subr.mxu0 0.0
  %247 = vmatpush1.msra.mxu0 %v212
  %248 = vmatprep.subr.mxu0 0.0
  %249 = vmatpush1.msra.mxu0 %v211
  %250 = vmatprep.subr.mxu0 0.0
  %251 = vmatpush1.msra.mxu0 %v210
  %252 = vmatprep.subr.mxu0 0.0
  %253 = vmatpush1.msra.mxu0 %v209
  %254 = vmatprep.subr.mxu0 0.0
  %255 = vmatpush1.msra.mxu0 %v208
  %256 = vmatprep.subr.mxu0 0.0
  %257 = vmatpush1.msra.mxu0 %v207
  %258 = vmatprep.subr.mxu0 0.0
  %259 = vmatpush2.msra.mxu0 0.0
  %260 = vmatprep.subr.mxu0 0.0
  %261 = vmatpush2.msra.mxu0 0.0
  %262 = vmatprep.subr.mxu0 0.0
  %263 = vmatpush2.msra.mxu0 0.0
  %264 = vmatprep.subr.mxu0 0.0
  %265 = vmatpush2.msra.mxu0 0.0
  %266 = vmatprep.subr.mxu0 0.0
  %267 = vmatpush2.msra.mxu0 0.0
  %268 = vmatprep.subr.mxu0 0.0
  %269 = vmatpush2.msra.mxu0 0.0
  %270 = vmatprep.subr.mxu0 0.0
  %271 = vmatpush2.msra.mxu0 0.0
  %272 = vmatprep.subr.mxu0 0.0
  %273 = vmatpush2.msra.mxu0 0.0
  %274 = vmatprep.subr.mxu0 0.0
  %275 = vmatpush2.msra.mxu0 0.0
  %276 = vmatprep.subr.mxu0 0.0
  %277 = vmatpush2.msra.mxu0 0.0
  %278 = vmatprep.subr.mxu0 0.0
  %279 = vmatpush2.msra.mxu0 0.0
  %280 = vmatprep.subr.mxu0 0.0
  %281 = vmatpush2.msra.mxu0 0.0
  %282 = vmatprep.subr.mxu0 0.0
  %283 = vmatpush2.msra.mxu0 0.0
  %284 = vmatprep.subr.mxu0 0.0
  %285 = vmatpush2.msra.mxu0 0.0
  %286 = vmatprep.subr.mxu0 0.0
  %287 = vmatpush2.msra.mxu0 0.0
  %288 = vmatprep.subr.mxu0 0.0
  %289 = vmatpush2.msra.mxu0 0.0
  %290 = vmatprep.mubr.f32.mxu0 0.0
  %291 = vmatmul.mubr.f32.gmra.mxu0 %v224
  %v292 = vpop.f32.mrf.mxu0
  %v293 = vadd.f32 %v220, %v292
  %v294 = vpop.f32.mrf.mxu0
  %295 = vdwg.mxu0
  %vm296 = vcmask 31744
  %297 = vst.msk [vmem:[%s7] sm:$0xff] %vm296, %v293
  // Predicated region
  $region30: #{domain_classifier_forward.1} parent=0 // pred_check
    _
  $region31: #{domain_classifier_forward.1} parent=0 // pred_check_branch
    %299 = sbr.rel (0) target = $region33
  $region32: #{domain_classifier_forward.1} parent=0 // pred_region
    _
  $region33: #{domain_classifier_forward.1} parent=0 // pred_fallthru
    _
  // Predicated region
  $region34: #{domain_classifier_forward.1} parent=0 // pred_check
    _
  $region35: #{domain_classifier_forward.1} parent=0 // pred_check_branch
    %301 = sbr.rel (0) target = $region37
  $region36: #{domain_classifier_forward.1} parent=0 // pred_region
    _
  $region37: #{domain_classifier_forward.1} parent=0 // pred_fallthru
    _

</llo_original>
